<compile_context>
chip_gen: v6e
topology: v6e:2x2x1
jax: 0.10.0
libtpu: 0.0.40
codegen_flags: <defaults>
</compile_context>

<pallas_src>
import jax
import jax.numpy as jnp
from jax.experimental import pallas as pl
from jax.experimental.pallas import tpu as pltpu

LANE = 128


def _round_up(x, m):
    return ((x + m - 1) // m) * m


def _cdiv(a, b):
    return (a + b - 1) // b


def mlp_kernel(x_ref, w1_ref, b1_ref, w2_ref, b2_ref, o_ref):
    """Fused: out = relu(x @ W1 + b1) @ W2 + b2  (dropout is identity in eval)."""
    # TODO(synk): nn.Dropout(p=0.5) is train-mode only; inference semantics
    # (identity) are implemented here.
    # x arrives as f32; cast to bf16 on the VPU inside VMEM so the wrapper
    # never writes a bf16 copy of x back to HBM.
    x = x_ref[...].astype(jnp.bfloat16)                       # (tm, dim_in) bf16
    # First Linear on the MXU in bf16, f32 accumulation.
    h = jnp.dot(x, w1_ref[...], preferred_element_type=jnp.float32)
    h = h + b1_ref[...]                                       # f32 bias broadcast
    h = jnp.maximum(h, 0.0)                                    # ReLU in f32 (VPU)
    # Second Linear: bf16 operands on the MXU, f32 accumulation.
    out = jnp.dot(h.astype(w2_ref.dtype), w2_ref[...],
                  preferred_element_type=jnp.float32)
    out = out + b2_ref[...]
    o_ref[...] = out.astype(o_ref.dtype)                       # bf16 writeback


def prepare_params(w1, b1, w2, b2):
    """One-time parameter prep (call once, reuse across forwards):
    bf16 weights for the MXU, f32 biases, output head lane-padded to 128."""
    dim_out = w2.shape[1]
    dim_out_p = _round_up(max(dim_out, LANE), LANE)
    w2p, b2p = w2, b2
    if dim_out_p != dim_out:
        w2p = jnp.pad(w2, ((0, 0), (0, dim_out_p - dim_out)))
        b2p = jnp.pad(b2, ((0, 0), (0, dim_out_p - dim_out)))
    return {
        "w1": w1.astype(jnp.bfloat16),
        "b1": b1.astype(jnp.float32),
        "w2": w2p.astype(jnp.bfloat16),
        "b2": b2p.astype(jnp.float32),
        "dim_out": dim_out,
    }


def mlp_forward(x_nchw, params, *, tile_m=512, out_dtype=jnp.bfloat16):
    """x_nchw: (B, C, H, W) float32; params from prepare_params()."""
    w1, b1, w2, b2 = params["w1"], params["b1"], params["w2"], params["b2"]
    dim_out = params["dim_out"]

    B = x_nchw.shape[0]
    dim_in = x_nchw.shape[1] * x_nchw.shape[-2] * x_nchw.shape[-1]
    x2d = x_nchw.reshape(B, dim_in).astype(jnp.float32)   # matches x.view(-1, C*H*W)
    dim_hidden = w1.shape[1]
    dim_out_p = w2.shape[1]

    # Balanced M tiling:
    #  * multiple of 16 (bf16 output sublane packing),
    #  * minimal padding waste (cdiv-balanced tiles instead of round_up(B, tile_m)),
    #  * >= 2 tiles when B >= 32 so v7x's two TensorCores both get work.
    if B <= 16:
        tm = max(16, _round_up(B, 16))
    else:
        n_tiles = _cdiv(B, tile_m)
        if n_tiles == 1 and B >= 32:
            n_tiles = 2
        tm = _round_up(_cdiv(B, n_tiles), 16)
    m_pad = _round_up(B, tm)
    if m_pad != B:
        x2d = jnp.pad(x2d, ((0, m_pad - B), (0, 0)))
    num_m_tiles = m_pad // tm

    cost = pl.CostEstimate(
        flops=2 * m_pad * (dim_in * dim_hidden + dim_hidden * dim_out_p),
        transcendentals=0,
        bytes_accessed=(m_pad * dim_in * 4            # x read (f32)
                        + w1.size * 2 + w2.size * 2   # bf16 weights
                        + b1.size * 4 + b2.size * 4   # f32 biases
                        + m_pad * dim_out_p * 2),     # bf16 output writeback
    )

    out_padded = pl.pallas_call(
        mlp_kernel,
        out_shape=jax.ShapeDtypeStruct((m_pad, dim_out_p), out_dtype),
        grid_spec=pltpu.PrefetchScalarGridSpec(
            num_scalar_prefetch=0,
            grid=(num_m_tiles,),
            in_specs=[
                # x tile: f32, double-buffered by the BlockSpec pipeline over M.
                pl.BlockSpec((tm, dim_in), lambda i: (i, 0)),
                # Weights / biases: constant index_map -> VMEM-resident.
                pl.BlockSpec((dim_in, dim_hidden), lambda i: (0, 0)),
                pl.BlockSpec((1, dim_hidden), lambda i: (0, 0)),
                pl.BlockSpec((dim_hidden, dim_out_p), lambda i: (0, 0)),
                pl.BlockSpec((1, dim_out_p), lambda i: (0, 0)),
            ],
            out_specs=pl.BlockSpec((tm, dim_out_p), lambda i: (i, 0)),
        ),
        compiler_params=pltpu.CompilerParams(
            # Independent M tiles: Mosaic may shard them across TCs (v7x).
            dimension_semantics=("parallel",),
            # Safe on all generations (v7x physical VMEM is 64 MiB).
            vmem_limit_bytes=32 * 1024 * 1024,
        ),
        cost_estimate=cost,
    )(x2d, w1, b1, w2, b2)

    # Drop batch padding and the lane padding of the output head.
    return out_padded[:B, :dim_out]


def init_params(key, dim_in, dim_hidden, dim_out, dtype=jnp.float32):
    """nn.Linear-style init: U(-1/sqrt(fan_in), +1/sqrt(fan_in)).
    Weights stored transposed relative to PyTorch ((in, out) instead of (out, in))."""
    k1, k2, k3, k4 = jax.random.split(key, 4)
    bound1 = 1.0 / jnp.sqrt(dim_in)
    bound2 = 1.0 / jnp.sqrt(dim_hidden)
    w1 = jax.random.uniform(k1, (dim_in, dim_hidden), dtype, -bound1, bound1)
    b1 = jax.random.uniform(k2, (1, dim_hidden), dtype, -bound1, bound1)
    w2 = jax.random.uniform(k3, (dim_hidden, dim_out), dtype, -bound2, bound2)
    b2 = jax.random.uniform(k4, (1, dim_out), dtype, -bound2, bound2)
    return w1, b1, w2, b2


if __name__ == "__main__":
    key = jax.random.PRNGKey(0)
    kx, kp = jax.random.split(key)

    # Small shapes consistent with the module: NCHW input, dim_in = C*H*W.
    # dim_out=64 also exercises the lane-padding (to 128) path.
    B, C, H, W = 2, 4, 16, 16
    dim_in = C * H * W          # 1024
    dim_hidden = 128
    dim_out = 64

    x = jax.random.normal(kx, (B, C, H, W), dtype=jnp.float32)
    w1, b1, w2, b2 = init_params(kp, dim_in, dim_hidden, dim_out)
    params = prepare_params(w1, b1, w2, b2)   # one-time bf16 cast + head padding

    out = jax.block_until_ready(mlp_forward(x, params))
    assert out.shape == (B, dim_out)

    # Pure-JAX reference with the same bf16-matmul / f32-accumulate semantics.
    x2d = x.reshape(B, dim_in)
    h_ref = jnp.dot(x2d.astype(jnp.bfloat16), w1.astype(jnp.bfloat16),
                    preferred_element_type=jnp.float32) + b1
    h_ref = jnp.maximum(h_ref, 0.0)
    ref = jnp.dot(h_ref.astype(jnp.bfloat16), w2.astype(jnp.bfloat16),
                  preferred_element_type=jnp.float32) + b2
    assert jnp.allclose(out.astype(jnp.float32), ref, atol=2e-2, rtol=2e-2)

    print("KERNEL_OK")
</pallas_src>

<mosaic_0001>
module attributes {stable_mosaic.version = 11 : i64} {
  func.func @mlp_kernel(%arg0: i32, %arg1: memref<16x1024xf32, #tpu.memory_space<vmem>>, %arg2: memref<1024x128xbf16, #tpu.memory_space<vmem>>, %arg3: memref<1x128xf32, #tpu.memory_space<vmem>>, %arg4: memref<128x128xbf16, #tpu.memory_space<vmem>>, %arg5: memref<1x128xf32, #tpu.memory_space<vmem>>, %arg6: memref<16x128xbf16, #tpu.memory_space<vmem>>) attributes {dimension_semantics = [#tpu.dimension_semantics<parallel>], iteration_bounds = array<i64: 1>, scalar_prefetch = 0 : i64, scratch_operands = 0 : i64, tpu.core_type = #tpu.core_type<tc>, window_params = [{transform_indices = @transform_0, window_bounds = array<i64: 16, 1024>}, {pipeline_mode = #tpu.pipeline_mode<synchronous>, transform_indices = @transform_1, window_bounds = array<i64: 1024, 128>}, {pipeline_mode = #tpu.pipeline_mode<synchronous>, transform_indices = @transform_2, window_bounds = array<i64: 1, 128>}, {pipeline_mode = #tpu.pipeline_mode<synchronous>, transform_indices = @transform_3, window_bounds = array<i64: 128, 128>}, {pipeline_mode = #tpu.pipeline_mode<synchronous>, transform_indices = @transform_4, window_bounds = array<i64: 1, 128>}, {transform_indices = @transform_5, window_bounds = array<i64: 16, 128>}]} {
    %c0 = arith.constant 0 : index
    %c0_0 = arith.constant 0 : index
    %0 = vector.load %arg1[%c0, %c0_0] : memref<16x1024xf32, #tpu.memory_space<vmem>>, vector<16x1024xf32>
    %1 = arith.truncf %0 : vector<16x1024xf32> to vector<16x1024xbf16>
    %c0_1 = arith.constant 0 : index
    %c0_2 = arith.constant 0 : index
    %2 = vector.load %arg2[%c0_1, %c0_2] : memref<1024x128xbf16, #tpu.memory_space<vmem>>, vector<1024x128xbf16>
    %cst = arith.constant dense<0.000000e+00> : vector<16x128xf32>
    %3 = tpu.matmul %1, %2, %cst {dimension_numbers = #tpu.dot_dimension_numbers<[1], [0], [0], [1], [0, 0, 1, 1], [], []>} : vector<16x1024xbf16>, vector<1024x128xbf16>, vector<16x128xf32> -> vector<16x128xf32>
    %c0_3 = arith.constant 0 : index
    %c0_4 = arith.constant 0 : index
    %4 = vector.load %arg3[%c0_3, %c0_4] : memref<1x128xf32, #tpu.memory_space<vmem>>, vector<1x128xf32>
    %5 = vector.broadcast %4 : vector<1x128xf32> to vector<16x128xf32>
    %6 = arith.addf %3, %5 : vector<16x128xf32>
    %cst_5 = arith.constant 0.000000e+00 : f32
    %7 = vector.broadcast %cst_5 : f32 to vector<16x128xf32>
    %8 = arith.maximumf %6, %7 : vector<16x128xf32>
    %9 = arith.truncf %8 : vector<16x128xf32> to vector<16x128xbf16>
    %c0_6 = arith.constant 0 : index
    %c0_7 = arith.constant 0 : index
    %10 = vector.load %arg4[%c0_6, %c0_7] : memref<128x128xbf16, #tpu.memory_space<vmem>>, vector<128x128xbf16>
    %cst_8 = arith.constant dense<0.000000e+00> : vector<16x128xf32>
    %11 = tpu.matmul %9, %10, %cst_8 {dimension_numbers = #tpu.dot_dimension_numbers<[1], [0], [0], [1], [0, 0, 1, 1], [], []>} : vector<16x128xbf16>, vector<128x128xbf16>, vector<16x128xf32> -> vector<16x128xf32>
    %c0_9 = arith.constant 0 : index
    %c0_10 = arith.constant 0 : index
    %12 = vector.load %arg5[%c0_9, %c0_10] : memref<1x128xf32, #tpu.memory_space<vmem>>, vector<1x128xf32>
    %13 = vector.broadcast %12 : vector<1x128xf32> to vector<16x128xf32>
    %14 = arith.addf %11, %13 : vector<16x128xf32>
    %15 = arith.truncf %14 : vector<16x128xf32> to vector<16x128xbf16>
    %c0_11 = arith.constant 0 : index
    %c0_12 = arith.constant 0 : index
    %16 = vector.load %arg6[%c0_11, %c0_12] : memref<16x128xbf16, #tpu.memory_space<vmem>>, vector<16x128xbf16>
    tpu.vector_store %arg6[%c0_11, %c0_12], %15 {strides = array<i32>} : memref<16x128xbf16, #tpu.memory_space<vmem>>, vector<16x128xbf16>,
    return
  }
  func.func @transform_0(%arg0: i32) -> (i32, i32) {
    %c0_i32 = arith.constant 0 : i32
    %c0_i32_0 = arith.constant 0 : i32
    return %arg0, %c0_i32 : i32, i32
  }
  func.func @transform_1(%arg0: i32) -> (i32, i32) {
    %c0_i32 = arith.constant 0 : i32
    %c0_i32_0 = arith.constant 0 : i32
    %c0_i32_1 = arith.constant 0 : i32
    return %c0_i32, %c0_i32_0 : i32, i32
  }
  func.func @transform_2(%arg0: i32) -> (i32, i32) {
    %c0_i32 = arith.constant 0 : i32
    %c0_i32_0 = arith.constant 0 : i32
    %c0_i32_1 = arith.constant 0 : i32
    return %c0_i32, %c0_i32_0 : i32, i32
  }
  func.func @transform_3(%arg0: i32) -> (i32, i32) {
    %c0_i32 = arith.constant 0 : i32
    %c0_i32_0 = arith.constant 0 : i32
    %c0_i32_1 = arith.constant 0 : i32
    return %c0_i32, %c0_i32_0 : i32, i32
  }
  func.func @transform_4(%arg0: i32) -> (i32, i32) {
    %c0_i32 = arith.constant 0 : i32
    %c0_i32_0 = arith.constant 0 : i32
    %c0_i32_1 = arith.constant 0 : i32
    return %c0_i32, %c0_i32_0 : i32, i32
  }
  func.func @transform_5(%arg0: i32) -> (i32, i32) {
    %c0_i32 = arith.constant 0 : i32
    %c0_i32_0 = arith.constant 0 : i32
    return %arg0, %c0_i32 : i32, i32
  }
}

</mosaic_0001>

<llo_original>
// kernel: tpu_custom_call.1
$region0: #{tpu_custom_call.1}
  #allocation0 [shape = 'u32[]', space=smem, size = 0x4, offset = 0x4, fixed_abs, tag = 'smem constant byte address 0x4 - core index']
  #allocation1 [shape = 'u32[144,128]{1,0:T(1,128)}', space=vmem, size = 0x12000, scoped, tag = 'internal scratch']
  %s0 = inlined_call_operand.hbm [shape: f32[16,1024], index: 0, kind: input, shape index: {}]
  %s1 = inlined_call_operand.hbm [shape: bf16[1024,128], index: 1, kind: input, shape index: {}]
  %s2 = inlined_call_operand.vmem [shape: f32[1,128], index: 2, kind: input, shape index: {}]
  %s3 = inlined_call_operand.hbm [shape: bf16[128,128], index: 3, kind: input, shape index: {}]
  %s4 = inlined_call_operand.vmem [shape: f32[1,128], index: 4, kind: input, shape index: {}]
  %s5 = inlined_call_operand.hbm [shape: bf16[16,128], index: 5, kind: output, shape index: {}]
  %s6 = sld [smem:[#allocation0]]
  $region42: #{tpu_custom_call.1} parent=0
    _
  %s8 = ssub.s32 1, %s6
  %s9 = scalar_select 0, %s8, %s6
  $region1: #{tpu_custom_call.1} parent=0
    #allocation2 [shape = 'u8[65536]{0}', space=vmem, size = 0x10000, scoped, tag = 'input window, operand 0, single buffered']
    #allocation3 [shape = 's32[1]{0}', space=sflag, size = 0x4, scoped, tag = 'scoped memory for tpu_custom_call.1']
    #allocation4 [shape = 's32[1]{0}', space=sflag, size = 0x4, scoped, tag = 'scoped memory for tpu_custom_call.1']
    #allocation5 [shape = 'u8[262144]{0}', space=vmem, size = 0x40000, scoped, tag = 'input window, operand 1, single buffered']
    #allocation6 [shape = 's32[1]{0}', space=sflag, size = 0x4, scoped, tag = 'scoped memory for tpu_custom_call.1']
    #allocation7 [shape = 'u8[32768]{0}', space=vmem, size = 0x8000, scoped, tag = 'input window, operand 3, single buffered']
    #allocation8 [shape = 'u8[4096]{0}', space=vmem, size = 0x1000, scoped, tag = 'output window, operand 0, single buffered']
    %10 = vsyncpa [#allocation3], 0
    %11 = vsyncpa [#allocation6], 0
    %12 = vsyncpa [#allocation4], 0
    // Predicated region
    $region2: #{tpu_custom_call.1} parent=1 // pred_check
      _
    $region3: #{tpu_custom_call.1} parent=1 // pred_check_branch
      %14 = sbr.rel (0) target = $region5
    $region4: #{tpu_custom_call.1} parent=1 // pred_region
      %s16 = ssub.s32 2048, 2048
      %17 = vsyncadd [#allocation3], %s16
      %s18 = sshll.u32 [#allocation2], 4
      %s19 = int_to_ptr.vmem [resolvable:$true] %s18
      %24 = dma.hbm_to_vmem [thread:$0]  %s0, 2048, %s19, [#allocation3], 1024, 1024, 64
    $region5: #{tpu_custom_call.1} parent=1 // pred_fallthru
      _
    // Predicated region
    $region6: #{tpu_custom_call.1} parent=1 // pred_check
      _
    $region7: #{tpu_custom_call.1} parent=1 // pred_check_branch
      %26 = sbr.rel (0) target = $region9
    $region8: #{tpu_custom_call.1} parent=1 // pred_region
      %s28 = ssub.s32 8192, 8192
      %29 = vsyncadd [#allocation6], %s28
      %s30 = sshll.u32 [#allocation5], 4
      %s31 = int_to_ptr.vmem [resolvable:$true] %s30
      %36 = dma.hbm_to_vmem [thread:$0]  %s1, 8192, %s31, [#allocation6], 64, 64, 4
    $region9: #{tpu_custom_call.1} parent=1 // pred_fallthru
      _
    // Predicated region
    $region10: #{tpu_custom_call.1} parent=1 // pred_check
      _
    $region11: #{tpu_custom_call.1} parent=1 // pred_check_branch
      %38 = sbr.rel (0) target = $region13
    $region12: #{tpu_custom_call.1} parent=1 // pred_region
      _
    $region13: #{tpu_custom_call.1} parent=1 // pred_fallthru
      _
    // Predicated region
    $region14: #{tpu_custom_call.1} parent=1 // pred_check
      _
    $region15: #{tpu_custom_call.1} parent=1 // pred_check_branch
      %40 = sbr.rel (0) target = $region17
    $region16: #{tpu_custom_call.1} parent=1 // pred_region
      %s42 = ssub.s32 1024, 1024
      %43 = vsyncadd [#allocation6], %s42
      %s44 = sshll.u32 [#allocation7], 4
      %s45 = int_to_ptr.vmem [resolvable:$true] %s44
      %50 = dma.hbm_to_vmem [thread:$0]  %s3, 1024, %s45, [#allocation6], 64, 64, 4
    $region17: #{tpu_custom_call.1} parent=1 // pred_fallthru
      _
    // Predicated region
    $region18: #{tpu_custom_call.1} parent=1 // pred_check
      _
    $region19: #{tpu_custom_call.1} parent=1 // pred_check_branch
      %52 = sbr.rel (0) target = $region21
    $region20: #{tpu_custom_call.1} parent=1 // pred_region
      _
    $region21: #{tpu_custom_call.1} parent=1 // pred_fallthru
      _
    // Predicated region
    $region22: #{tpu_custom_call.1} parent=1 // pred_check
      _
    $region23: #{tpu_custom_call.1} parent=1 // pred_check_branch
      %54 = sbr.rel (0) target = $region25
    $region24: #{tpu_custom_call.1} parent=1 // pred_region
      %55 = dma.done [#allocation3], 2048
    $region25: #{tpu_custom_call.1} parent=1 // pred_fallthru
      _
    // Predicated region
    $region26: #{tpu_custom_call.1} parent=1 // pred_check
      _
    $region27: #{tpu_custom_call.1} parent=1 // pred_check_branch
      %57 = sbr.rel (0) target = $region29
    $region28: #{tpu_custom_call.1} parent=1 // pred_region
      %58 = dma.done [#allocation6], 8192
    $region29: #{tpu_custom_call.1} parent=1 // pred_fallthru
      _
    // Predicated region
    $region30: #{tpu_custom_call.1} parent=1 // pred_check
      _
    $region31: #{tpu_custom_call.1} parent=1 // pred_check_branch
      %60 = sbr.rel (0) target = $region33
    $region32: #{tpu_custom_call.1} parent=1 // pred_region
      %61 = dma.done [#allocation6], 1024
    $region33: #{tpu_custom_call.1} parent=1 // pred_fallthru
      _
    %v63 = vld [vmem:[#allocation2] sm:$0xff]
    %v64 = vld [vmem:[#allocation2 + $0x8] sm:$0xff]
    %v65 = vld [vmem:[#allocation2 + $0x10] sm:$0xff]
    %v66 = vld [vmem:[#allocation2 + $0x18] sm:$0xff]
    %v67 = vld [vmem:[#allocation2 + $0x20] sm:$0xff]
    %v68 = vld [vmem:[#allocation2 + $0x28] sm:$0xff]
    %v69 = vld [vmem:[#allocation2 + $0x30] sm:$0xff]
    %v70 = vld [vmem:[#allocation2 + $0x38] sm:$0xff]
    %v71 = vld [vmem:[#allocation2 + $0x40] sm:$0xff]
    %v72 = vld [vmem:[#allocation2 + $0x48] sm:$0xff]
    %v73 = vld [vmem:[#allocation2 + $0x50] sm:$0xff]
    %v74 = vld [vmem:[#allocation2 + $0x58] sm:$0xff]
    %v75 = vld [vmem:[#allocation2 + $0x60] sm:$0xff]
    %v76 = vld [vmem:[#allocation2 + $0x68] sm:$0xff]
    %v77 = vld [vmem:[#allocation2 + $0x70] sm:$0xff]
    %v78 = vld [vmem:[#allocation2 + $0x78] sm:$0xff]
    %v79 = vpack.c.bf16 %v71, %v63
    %v80 = vpack.c.bf16 %v72, %v64
    %v81 = vpack.c.bf16 %v73, %v65
    %v82 = vpack.c.bf16 %v74, %v66
    %v83 = vpack.c.bf16 %v75, %v67
    %v84 = vpack.c.bf16 %v76, %v68
    %v85 = vpack.c.bf16 %v77, %v69
    %v86 = vpack.c.bf16 %v78, %v70
    %v87 = vld [vmem:[#allocation5] sm:$0xf]
    %v88 = vld [vmem:[#allocation5 + $0x4] sm:$0xf]
    %v89 = vld [vmem:[#allocation5 + $0x8] sm:$0xf]
    %v90 = vld [vmem:[#allocation5 + $0xc] sm:$0xf]
    %v91 = vld [vmem:[#allocation5 + $0x10] sm:$0xf]
    %v92 = vld [vmem:[#allocation5 + $0x14] sm:$0xf]
    %v93 = vld [vmem:[#allocation5 + $0x18] sm:$0xf]
    %v94 = vld [vmem:[#allocation5 + $0x1c] sm:$0xf]
    %v95 = vld [vmem:[#allocation5 + $0x20] sm:$0xf]
    %v96 = vld [vmem:[#allocation5 + $0x24] sm:$0xf]
    %v97 = vld [vmem:[#allocation5 + $0x28] sm:$0xf]
    %v98 = vld [vmem:[#allocation5 + $0x2c] sm:$0xf]
    %v99 = vld [vmem:[#allocation5 + $0x30] sm:$0xf]
    %v100 = vld [vmem:[#allocation5 + $0x34] sm:$0xf]
    %v101 = vld [vmem:[#allocation5 + $0x38] sm:$0xf]
    %v102 = vld [vmem:[#allocation5 + $0x3c] sm:$0xf]
    %v103 = vld [vmem:[#allocation5 + $0x40] sm:$0xf]
    %v104 = vld [vmem:[#allocation5 + $0x44] sm:$0xf]
    %v105 = vld [vmem:[#allocation5 + $0x48] sm:$0xf]
    %v106 = vld [vmem:[#allocation5 + $0x4c] sm:$0xf]
    %v107 = vld [vmem:[#allocation5 + $0x50] sm:$0xf]
    %v108 = vld [vmem:[#allocation5 + $0x54] sm:$0xf]
    %v109 = vld [vmem:[#allocation5 + $0x58] sm:$0xf]
    %v110 = vld [vmem:[#allocation5 + $0x5c] sm:$0xf]
    %v111 = vld [vmem:[#allocation5 + $0x60] sm:$0xf]
    %v112 = vld [vmem:[#allocation5 + $0x64] sm:$0xf]
    %v113 = vld [vmem:[#allocation5 + $0x68] sm:$0xf]
    %v114 = vld [vmem:[#allocation5 + $0x6c] sm:$0xf]
    %v115 = vld [vmem:[#allocation5 + $0x70] sm:$0xf]
    %v116 = vld [vmem:[#allocation5 + $0x74] sm:$0xf]
    %v117 = vld [vmem:[#allocation5 + $0x78] sm:$0xf]
    %v118 = vld [vmem:[#allocation5 + $0x7c] sm:$0xf]
    %v119 = vld [vmem:[#allocation5 + $0x80] sm:$0xf]
    %v120 = vld [vmem:[#allocation5 + $0x84] sm:$0xf]
    %v121 = vld [vmem:[#allocation5 + $0x88] sm:$0xf]
    %v122 = vld [vmem:[#allocation5 + $0x8c] sm:$0xf]
    %v123 = vld [vmem:[#allocation5 + $0x90] sm:$0xf]
    %v124 = vld [vmem:[#allocation5 + $0x94] sm:$0xf]
    %v125 = vld [vmem:[#allocation5 + $0x98] sm:$0xf]
    %v126 = vld [vmem:[#allocation5 + $0x9c] sm:$0xf]
    %v127 = vld [vmem:[#allocation5 + $0xa0] sm:$0xf]
    %v128 = vld [vmem:[#allocation5 + $0xa4] sm:$0xf]
    %v129 = vld [vmem:[#allocation5 + $0xa8] sm:$0xf]
    %v130 = vld [vmem:[#allocation5 + $0xac] sm:$0xf]
    %v131 = vld [vmem:[#allocation5 + $0xb0] sm:$0xf]
    %v132 = vld [vmem:[#allocation5 + $0xb4] sm:$0xf]
    %v133 = vld [vmem:[#allocation5 + $0xb8] sm:$0xf]
    %v134 = vld [vmem:[#allocation5 + $0xbc] sm:$0xf]
    %v135 = vld [vmem:[#allocation5 + $0xc0] sm:$0xf]
    %v136 = vld [vmem:[#allocation5 + $0xc4] sm:$0xf]
    %v137 = vld [vmem:[#allocation5 + $0xc8] sm:$0xf]
    %v138 = vld [vmem:[#allocation5 + $0xcc] sm:$0xf]
    %v139 = vld [vmem:[#allocation5 + $0xd0] sm:$0xf]
    %v140 = vld [vmem:[#allocation5 + $0xd4] sm:$0xf]
    %v141 = vld [vmem:[#allocation5 + $0xd8] sm:$0xf]
    %v142 = vld [vmem:[#allocation5 + $0xdc] sm:$0xf]
    %v143 = vld [vmem:[#allocation5 + $0xe0] sm:$0xf]
    %v144 = vld [vmem:[#allocation5 + $0xe4] sm:$0xf]
    %v145 = vld [vmem:[#allocation5 + $0xe8] sm:$0xf]
    %v146 = vld [vmem:[#allocation5 + $0xec] sm:$0xf]
    %v147 = vld [vmem:[#allocation5 + $0xf0] sm:$0xf]
    %v148 = vld [vmem:[#allocation5 + $0xf4] sm:$0xf]
    %v149 = vld [vmem:[#allocation5 + $0xf8] sm:$0xf]
    %v150 = vld [vmem:[#allocation5 + $0xfc] sm:$0xf]
    %v151 = vld [vmem:[#allocation5 + $0x100] sm:$0xf]
    %v152 = vld [vmem:[#allocation5 + $0x104] sm:$0xf]
    %v153 = vld [vmem:[#allocation5 + $0x108] sm:$0xf]
    %v154 = vld [vmem:[#allocation5 + $0x10c] sm:$0xf]
    %v155 = vld [vmem:[#allocation5 + $0x110] sm:$0xf]
    %v156 = vld [vmem:[#allocation5 + $0x114] sm:$0xf]
    %v157 = vld [vmem:[#allocation5 + $0x118] sm:$0xf]
    %v158 = vld [vmem:[#allocation5 + $0x11c] sm:$0xf]
    %v159 = vld [vmem:[#allocation5 + $0x120] sm:$0xf]
    %v160 = vld [vmem:[#allocation5 + $0x124] sm:$0xf]
    %v161 = vld [vmem:[#allocation5 + $0x128] sm:$0xf]
    %v162 = vld [vmem:[#allocation5 + $0x12c] sm:$0xf]
    %v163 = vld [vmem:[#allocation5 + $0x130] sm:$0xf]
    %v164 = vld [vmem:[#allocation5 + $0x134] sm:$0xf]
    %v165 = vld [vmem:[#allocation5 + $0x138] sm:$0xf]
    %v166 = vld [vmem:[#allocation5 + $0x13c] sm:$0xf]
    %v167 = vld [vmem:[#allocation5 + $0x140] sm:$0xf]
    %v168 = vld [vmem:[#allocation5 + $0x144] sm:$0xf]
    %v169 = vld [vmem:[#allocation5 + $0x148] sm:$0xf]
    %v170 = vld [vmem:[#allocation5 + $0x14c] sm:$0xf]
    %v171 = vld [vmem:[#allocation5 + $0x150] sm:$0xf]
    %v172 = vld [vmem:[#allocation5 + $0x154] sm:$0xf]
    %v173 = vld [vmem:[#allocation5 + $0x158] sm:$0xf]
    %v174 = vld [vmem:[#allocation5 + $0x15c] sm:$0xf]
    %v175 = vld [vmem:[#allocation5 + $0x160] sm:$0xf]
    %v176 = vld [vmem:[#allocation5 + $0x164] sm:$0xf]
    %v177 = vld [vmem:[#allocation5 + $0x168] sm:$0xf]
    %v178 = vld [vmem:[#allocation5 + $0x16c] sm:$0xf]
    %v179 = vld [vmem:[#allocation5 + $0x170] sm:$0xf]
    %v180 = vld [vmem:[#allocation5 + $0x174] sm:$0xf]
    %v181 = vld [vmem:[#allocation5 + $0x178] sm:$0xf]
    %v182 = vld [vmem:[#allocation5 + $0x17c] sm:$0xf]
    %v183 = vld [vmem:[#allocation5 + $0x180] sm:$0xf]
    %v184 = vld [vmem:[#allocation5 + $0x184] sm:$0xf]
    %v185 = vld [vmem:[#allocation5 + $0x188] sm:$0xf]
    %v186 = vld [vmem:[#allocation5 + $0x18c] sm:$0xf]
    %v187 = vld [vmem:[#allocation5 + $0x190] sm:$0xf]
    %v188 = vld [vmem:[#allocation5 + $0x194] sm:$0xf]
    %v189 = vld [vmem:[#allocation5 + $0x198] sm:$0xf]
    %v190 = vld [vmem:[#allocation5 + $0x19c] sm:$0xf]
    %v191 = vld [vmem:[#allocation5 + $0x1a0] sm:$0xf]
    %v192 = vld [vmem:[#allocation5 + $0x1a4] sm:$0xf]
    %v193 = vld [vmem:[#allocation5 + $0x1a8] sm:$0xf]
    %v194 = vld [vmem:[#allocation5 + $0x1ac] sm:$0xf]
    %v195 = vld [vmem:[#allocation5 + $0x1b0] sm:$0xf]
    %v196 = vld [vmem:[#allocation5 + $0x1b4] sm:$0xf]
    %v197 = vld [vmem:[#allocation5 + $0x1b8] sm:$0xf]
    %v198 = vld [vmem:[#allocation5 + $0x1bc] sm:$0xf]
    %v199 = vld [vmem:[#allocation5 + $0x1c0] sm:$0xf]
    %v200 = vld [vmem:[#allocation5 + $0x1c4] sm:$0xf]
    %v201 = vld [vmem:[#allocation5 + $0x1c8] sm:$0xf]
    %v202 = vld [vmem:[#allocation5 + $0x1cc] sm:$0xf]
    %v203 = vld [vmem:[#allocation5 + $0x1d0] sm:$0xf]
    %v204 = vld [vmem:[#allocation5 + $0x1d4] sm:$0xf]
    %v205 = vld [vmem:[#allocation5 + $0x1d8] sm:$0xf]
    %v206 = vld [vmem:[#allocation5 + $0x1dc] sm:$0xf]
    %v207 = vld [vmem:[#allocation5 + $0x1e0] sm:$0xf]
    %v208 = vld [vmem:[#allocation5 + $0x1e4] sm:$0xf]
    %v209 = vld [vmem:[#allocation5 + $0x1e8] sm:$0xf]
    %v210 = vld [vmem:[#allocation5 + $0x1ec] sm:$0xf]
    %v211 = vld [vmem:[#allocation5 + $0x1f0] sm:$0xf]
    %v212 = vld [vmem:[#allocation5 + $0x1f4] sm:$0xf]
    %v213 = vld [vmem:[#allocation5 + $0x1f8] sm:$0xf]
    %v214 = vld [vmem:[#allocation5 + $0x1fc] sm:$0xf]
    %v215 = vld [vmem:[%s2] sm:$0x1]
    %v217 = vlaneseq
    %v218 = vshrl.u32 %v217, 7
    %v219 = vsub.s32 0, %v218
    %v220 = vrot.slane %v215, %v219
    %v350 = vunpack.c.l.b16 %v87
    %v351 = vunpack.c.l.b16 %v88
    %v352 = vunpack.c.l.b16 %v89
    %v353 = vunpack.c.l.b16 %v90
    %v354 = vunpack.c.l.b16 %v91
    %v355 = vunpack.c.l.b16 %v92
    %v356 = vunpack.c.l.b16 %v93
    %v357 = vunpack.c.l.b16 %v94
    %v358 = vunpack.c.l.b16 %v95
    %v359 = vunpack.c.l.b16 %v96
    %v360 = vunpack.c.l.b16 %v97
    %v361 = vunpack.c.l.b16 %v98
    %v362 = vunpack.c.l.b16 %v99
    %v363 = vunpack.c.l.b16 %v100
    %v364 = vunpack.c.l.b16 %v101
    %v365 = vunpack.c.l.b16 %v102
    %v366 = vunpack.c.l.b16 %v103
    %v367 = vunpack.c.l.b16 %v104
    %v368 = vunpack.c.l.b16 %v105
    %v369 = vunpack.c.l.b16 %v106
    %v370 = vunpack.c.l.b16 %v107
    %v371 = vunpack.c.l.b16 %v108
    %v372 = vunpack.c.l.b16 %v109
    %v373 = vunpack.c.l.b16 %v110
    %v374 = vunpack.c.l.b16 %v111
    %v375 = vunpack.c.l.b16 %v112
    %v376 = vunpack.c.l.b16 %v113
    %v377 = vunpack.c.l.b16 %v114
    %v378 = vunpack.c.l.b16 %v115
    %v379 = vunpack.c.l.b16 %v116
    %v380 = vunpack.c.l.b16 %v117
    %v381 = vunpack.c.l.b16 %v118
    %v382 = vunpack.c.l.b16 %v119
    %v383 = vunpack.c.l.b16 %v120
    %v384 = vunpack.c.l.b16 %v121
    %v385 = vunpack.c.l.b16 %v122
    %v386 = vunpack.c.l.b16 %v123
    %v387 = vunpack.c.l.b16 %v124
    %v388 = vunpack.c.l.b16 %v125
    %v389 = vunpack.c.l.b16 %v126
    %v390 = vunpack.c.l.b16 %v127
    %v391 = vunpack.c.l.b16 %v128
    %v392 = vunpack.c.l.b16 %v129
    %v393 = vunpack.c.l.b16 %v130
    %v394 = vunpack.c.l.b16 %v131
    %v395 = vunpack.c.l.b16 %v132
    %v396 = vunpack.c.l.b16 %v133
    %v397 = vunpack.c.l.b16 %v134
    %v398 = vunpack.c.l.b16 %v135
    %v399 = vunpack.c.l.b16 %v136
    %v400 = vunpack.c.l.b16 %v137
    %v401 = vunpack.c.l.b16 %v138
    %v402 = vunpack.c.l.b16 %v139
    %v403 = vunpack.c.l.b16 %v140
    %v404 = vunpack.c.l.b16 %v141
    %v405 = vunpack.c.l.b16 %v142
    %v406 = vunpack.c.l.b16 %v143
    %v407 = vunpack.c.l.b16 %v144
    %v408 = vunpack.c.l.b16 %v145
    %v409 = vunpack.c.l.b16 %v146
    %v410 = vunpack.c.l.b16 %v147
    %v411 = vunpack.c.l.b16 %v148
    %v412 = vunpack.c.l.b16 %v149
    %v413 = vunpack.c.l.b16 %v150
    %v414 = vunpack.c.l.b16 %v151
    %v415 = vunpack.c.l.b16 %v152
    %v416 = vunpack.c.l.b16 %v153
    %v417 = vunpack.c.l.b16 %v154
    %v418 = vunpack.c.l.b16 %v155
    %v419 = vunpack.c.l.b16 %v156
    %v420 = vunpack.c.l.b16 %v157
    %v421 = vunpack.c.l.b16 %v158
    %v422 = vunpack.c.l.b16 %v159
    %v423 = vunpack.c.l.b16 %v160
    %v424 = vunpack.c.l.b16 %v161
    %v425 = vunpack.c.l.b16 %v162
    %v426 = vunpack.c.l.b16 %v163
    %v427 = vunpack.c.l.b16 %v164
    %v428 = vunpack.c.l.b16 %v165
    %v429 = vunpack.c.l.b16 %v166
    %v430 = vunpack.c.l.b16 %v167
    %v431 = vunpack.c.l.b16 %v168
    %v432 = vunpack.c.l.b16 %v169
    %v433 = vunpack.c.l.b16 %v170
    %v434 = vunpack.c.l.b16 %v171
    %v435 = vunpack.c.l.b16 %v172
    %v436 = vunpack.c.l.b16 %v173
    %v437 = vunpack.c.l.b16 %v174
    %v438 = vunpack.c.l.b16 %v175
    %v439 = vunpack.c.l.b16 %v176
    %v440 = vunpack.c.l.b16 %v177
    %v441 = vunpack.c.l.b16 %v178
    %v442 = vunpack.c.l.b16 %v179
    %v443 = vunpack.c.l.b16 %v180
    %v444 = vunpack.c.l.b16 %v181
    %v445 = vunpack.c.l.b16 %v182
    %v446 = vunpack.c.l.b16 %v183
    %v447 = vunpack.c.l.b16 %v184
    %v448 = vunpack.c.l.b16 %v185
    %v449 = vunpack.c.l.b16 %v186
    %v450 = vunpack.c.l.b16 %v187
    %v451 = vunpack.c.l.b16 %v188
    %v452 = vunpack.c.l.b16 %v189
    %v453 = vunpack.c.l.b16 %v190
    %v454 = vunpack.c.l.b16 %v191
    %v455 = vunpack.c.l.b16 %v192
    %v456 = vunpack.c.l.b16 %v193
    %v457 = vunpack.c.l.b16 %v194
    %v458 = vunpack.c.l.b16 %v195
    %v459 = vunpack.c.l.b16 %v196
    %v460 = vunpack.c.l.b16 %v197
    %v461 = vunpack.c.l.b16 %v198
    %v462 = vunpack.c.l.b16 %v199
    %v463 = vunpack.c.l.b16 %v200
    %v464 = vunpack.c.l.b16 %v201
    %v465 = vunpack.c.l.b16 %v202
    %v466 = vunpack.c.l.b16 %v203
    %v467 = vunpack.c.l.b16 %v204
    %v468 = vunpack.c.l.b16 %v205
    %v469 = vunpack.c.l.b16 %v206
    %v470 = vunpack.c.l.b16 %v207
    %v471 = vunpack.c.l.b16 %v208
    %v472 = vunpack.c.l.b16 %v209
    %v473 = vunpack.c.l.b16 %v210
    %v474 = vunpack.c.l.b16 %v211
    %v475 = vunpack.c.l.b16 %v212
    %v476 = vunpack.c.l.b16 %v213
    %v477 = vunpack.c.l.b16 %v214
    %v478 = vpack.c.b16 %v351, %v350
    %v479 = vpack.c.b16 %v353, %v352
    %v480 = vpack.c.b16 %v355, %v354
    %v481 = vpack.c.b16 %v357, %v356
    %v482 = vpack.c.b16 %v359, %v358
    %v483 = vpack.c.b16 %v361, %v360
    %v484 = vpack.c.b16 %v363, %v362
    %v485 = vpack.c.b16 %v365, %v364
    %v486 = vpack.c.b16 %v367, %v366
    %v487 = vpack.c.b16 %v369, %v368
    %v488 = vpack.c.b16 %v371, %v370
    %v489 = vpack.c.b16 %v373, %v372
    %v490 = vpack.c.b16 %v375, %v374
    %v491 = vpack.c.b16 %v377, %v376
    %v492 = vpack.c.b16 %v379, %v378
    %v493 = vpack.c.b16 %v381, %v380
    %v494 = vpack.c.b16 %v383, %v382
    %v495 = vpack.c.b16 %v385, %v384
    %v496 = vpack.c.b16 %v387, %v386
    %v497 = vpack.c.b16 %v389, %v388
    %v498 = vpack.c.b16 %v391, %v390
    %v499 = vpack.c.b16 %v393, %v392
    %v500 = vpack.c.b16 %v395, %v394
    %v501 = vpack.c.b16 %v397, %v396
    %v502 = vpack.c.b16 %v399, %v398
    %v503 = vpack.c.b16 %v401, %v400
    %v504 = vpack.c.b16 %v403, %v402
    %v505 = vpack.c.b16 %v405, %v404
    %v506 = vpack.c.b16 %v407, %v406
    %v507 = vpack.c.b16 %v409, %v408
    %v508 = vpack.c.b16 %v411, %v410
    %v509 = vpack.c.b16 %v413, %v412
    %v510 = vpack.c.b16 %v415, %v414
    %v511 = vpack.c.b16 %v417, %v416
    %v512 = vpack.c.b16 %v419, %v418
    %v513 = vpack.c.b16 %v421, %v420
    %v514 = vpack.c.b16 %v423, %v422
    %v515 = vpack.c.b16 %v425, %v424
    %v516 = vpack.c.b16 %v427, %v426
    %v517 = vpack.c.b16 %v429, %v428
    %v518 = vpack.c.b16 %v431, %v430
    %v519 = vpack.c.b16 %v433, %v432
    %v520 = vpack.c.b16 %v435, %v434
    %v521 = vpack.c.b16 %v437, %v436
    %v522 = vpack.c.b16 %v439, %v438
    %v523 = vpack.c.b16 %v441, %v440
    %v524 = vpack.c.b16 %v443, %v442
    %v525 = vpack.c.b16 %v445, %v444
    %v526 = vpack.c.b16 %v447, %v446
    %v527 = vpack.c.b16 %v449, %v448
    %v528 = vpack.c.b16 %v451, %v450
    %v529 = vpack.c.b16 %v453, %v452
    %v530 = vpack.c.b16 %v455, %v454
    %v531 = vpack.c.b16 %v457, %v456
    %v532 = vpack.c.b16 %v459, %v458
    %v533 = vpack.c.b16 %v461, %v460
    %v534 = vpack.c.b16 %v463, %v462
    %v535 = vpack.c.b16 %v465, %v464
    %v536 = vpack.c.b16 %v467, %v466
    %v537 = vpack.c.b16 %v469, %v468
    %v538 = vpack.c.b16 %v471, %v470
    %v539 = vpack.c.b16 %v473, %v472
    %v540 = vpack.c.b16 %v475, %v474
    %v541 = vpack.c.b16 %v477, %v476
    %606 = vmatprep.subr.bf16.mxu0 0
    %607 = vmatpush1.bf16.msra.mxu0 %v485
    %608 = vmatprep.subr.bf16.mxu0 0
    %609 = vmatpush1.bf16.msra.mxu0 %v484
    %610 = vmatprep.subr.bf16.mxu0 0
    %611 = vmatpush1.bf16.msra.mxu0 %v483
    %612 = vmatprep.subr.bf16.mxu0 0
    %613 = vmatpush1.bf16.msra.mxu0 %v482
    %614 = vmatprep.subr.bf16.mxu0 0
    %615 = vmatpush1.bf16.msra.mxu0 %v481
    %616 = vmatprep.subr.bf16.mxu0 0
    %617 = vmatpush1.bf16.msra.mxu0 %v480
    %618 = vmatprep.subr.bf16.mxu0 0
    %619 = vmatpush1.bf16.msra.mxu0 %v479
    %620 = vmatprep.subr.bf16.mxu0 0
    %621 = vmatpush1.bf16.msra.mxu0 %v478
    %622 = vmatprep.subr.bf16.mxu0 0
    %623 = vmatpush2.bf16.msra.mxu0 %v493
    %624 = vmatprep.subr.bf16.mxu0 0
    %625 = vmatpush2.bf16.msra.mxu0 %v492
    %626 = vmatprep.subr.bf16.mxu0 0
    %627 = vmatpush2.bf16.msra.mxu0 %v491
    %628 = vmatprep.subr.bf16.mxu0 0
    %629 = vmatpush2.bf16.msra.mxu0 %v490
    %630 = vmatprep.subr.bf16.mxu0 0
    %631 = vmatpush2.bf16.msra.mxu0 %v489
    %632 = vmatprep.subr.bf16.mxu0 0
    %633 = vmatpush2.bf16.msra.mxu0 %v488
    %634 = vmatprep.subr.bf16.mxu0 0
    %635 = vmatpush2.bf16.msra.mxu0 %v487
    %636 = vmatprep.subr.bf16.mxu0 0
    %637 = vmatpush2.bf16.msra.mxu0 %v486
    %638 = vmatprep.mubr.bf16.mxu0 %v80
    %639 = vmatmul.mubr.bf16.gmra.mxu0 %v79
    %v640 = vpop.f32.mrf.mxu0
    %v641 = vadd.f32 %v220, %v640
    %v642 = vpop.f32.mrf.mxu0
    %v643 = vpop.f32.mrf.mxu0
    %v644 = vadd.f32 %v220, %v643
    %v645 = vpop.f32.mrf.mxu0
    %646 = vdwg.mxu0
    %647 = vmatprep.subr.bf16.mxu0 0
    %648 = vmatpush1.bf16.msra.mxu0 %v501
    %649 = vmatprep.subr.bf16.mxu0 0
    %650 = vmatpush1.bf16.msra.mxu0 %v500
    %651 = vmatprep.subr.bf16.mxu0 0
    %652 = vmatpush1.bf16.msra.mxu0 %v499
    %653 = vmatprep.subr.bf16.mxu0 0
    %654 = vmatpush1.bf16.msra.mxu0 %v498
    %655 = vmatprep.subr.bf16.mxu0 0
    %656 = vmatpush1.bf16.msra.mxu0 %v497
    %657 = vmatprep.subr.bf16.mxu0 0
    %658 = vmatpush1.bf16.msra.mxu0 %v496
    %659 = vmatprep.subr.bf16.mxu0 0
    %660 = vmatpush1.bf16.msra.mxu0 %v495
    %661 = vmatprep.subr.bf16.mxu0 0
    %662 = vmatpush1.bf16.msra.mxu0 %v494
    %663 = vmatprep.subr.bf16.mxu0 0
    %664 = vmatpush2.bf16.msra.mxu0 %v509
    %665 = vmatprep.subr.bf16.mxu0 0
    %666 = vmatpush2.bf16.msra.mxu0 %v508
    %667 = vmatprep.subr.bf16.mxu0 0
    %668 = vmatpush2.bf16.msra.mxu0 %v507
    %669 = vmatprep.subr.bf16.mxu0 0
    %670 = vmatpush2.bf16.msra.mxu0 %v506
    %671 = vmatprep.subr.bf16.mxu0 0
    %672 = vmatpush2.bf16.msra.mxu0 %v505
    %673 = vmatprep.subr.bf16.mxu0 0
    %674 = vmatpush2.bf16.msra.mxu0 %v504
    %675 = vmatprep.subr.bf16.mxu0 0
    %676 = vmatpush2.bf16.msra.mxu0 %v503
    %677 = vmatprep.subr.bf16.mxu0 0
    %678 = vmatpush2.bf16.msra.mxu0 %v502
    %679 = vmatprep.mubr.bf16.mxu0 %v82
    %680 = vmatmul.mubr.bf16.gmra.mxu0 %v81
    %v681 = vpop.f32.mrf.mxu0
    %v682 = vadd.f32 %v641, %v681
    %v683 = vpop.f32.mrf.mxu0
    %v684 = vpop.f32.mrf.mxu0
    %v685 = vadd.f32 %v644, %v684
    %v686 = vpop.f32.mrf.mxu0
    %687 = vdwg.mxu0
    %688 = vmatprep.subr.bf16.mxu0 0
    %689 = vmatpush1.bf16.msra.mxu0 %v517
    %690 = vmatprep.subr.bf16.mxu0 0
    %691 = vmatpush1.bf16.msra.mxu0 %v516
    %692 = vmatprep.subr.bf16.mxu0 0
    %693 = vmatpush1.bf16.msra.mxu0 %v515
    %694 = vmatprep.subr.bf16.mxu0 0
    %695 = vmatpush1.bf16.msra.mxu0 %v514
    %696 = vmatprep.subr.bf16.mxu0 0
    %697 = vmatpush1.bf16.msra.mxu0 %v513
    %698 = vmatprep.subr.bf16.mxu0 0
    %699 = vmatpush1.bf16.msra.mxu0 %v512
    %700 = vmatprep.subr.bf16.mxu0 0
    %701 = vmatpush1.bf16.msra.mxu0 %v511
    %702 = vmatprep.subr.bf16.mxu0 0
    %703 = vmatpush1.bf16.msra.mxu0 %v510
    %704 = vmatprep.subr.bf16.mxu0 0
    %705 = vmatpush2.bf16.msra.mxu0 %v525
    %706 = vmatprep.subr.bf16.mxu0 0
    %707 = vmatpush2.bf16.msra.mxu0 %v524
    %708 = vmatprep.subr.bf16.mxu0 0
    %709 = vmatpush2.bf16.msra.mxu0 %v523
    %710 = vmatprep.subr.bf16.mxu0 0
    %711 = vmatpush2.bf16.msra.mxu0 %v522
    %712 = vmatprep.subr.bf16.mxu0 0
    %713 = vmatpush2.bf16.msra.mxu0 %v521
    %714 = vmatprep.subr.bf16.mxu0 0
    %715 = vmatpush2.bf16.msra.mxu0 %v520
    %716 = vmatprep.subr.bf16.mxu0 0
    %717 = vmatpush2.bf16.msra.mxu0 %v519
    %718 = vmatprep.subr.bf16.mxu0 0
    %719 = vmatpush2.bf16.msra.mxu0 %v518
    %720 = vmatprep.mubr.bf16.mxu0 %v84
    %721 = vmatmul.mubr.bf16.gmra.mxu0 %v83
    %v722 = vpop.f32.mrf.mxu0
    %v723 = vadd.f32 %v682, %v722
    %v724 = vpop.f32.mrf.mxu0
    %v725 = vpop.f32.mrf.mxu0
    %v726 = vadd.f32 %v685, %v725
    %v727 = vpop.f32.mrf.mxu0
    %728 = vdwg.mxu0
    %729 = vmatprep.subr.bf16.mxu0 0
    %730 = vmatpush1.bf16.msra.mxu0 %v533
    %731 = vmatprep.subr.bf16.mxu0 0
    %732 = vmatpush1.bf16.msra.mxu0 %v532
    %733 = vmatprep.subr.bf16.mxu0 0
    %734 = vmatpush1.bf16.msra.mxu0 %v531
    %735 = vmatprep.subr.bf16.mxu0 0
    %736 = vmatpush1.bf16.msra.mxu0 %v530
    %737 = vmatprep.subr.bf16.mxu0 0
    %738 = vmatpush1.bf16.msra.mxu0 %v529
    %739 = vmatprep.subr.bf16.mxu0 0
    %740 = vmatpush1.bf16.msra.mxu0 %v528
    %741 = vmatprep.subr.bf16.mxu0 0
    %742 = vmatpush1.bf16.msra.mxu0 %v527
    %743 = vmatprep.subr.bf16.mxu0 0
    %744 = vmatpush1.bf16.msra.mxu0 %v526
    %745 = vmatprep.subr.bf16.mxu0 0
    %746 = vmatpush2.bf16.msra.mxu0 %v541
    %747 = vmatprep.subr.bf16.mxu0 0
    %748 = vmatpush2.bf16.msra.mxu0 %v540
    %749 = vmatprep.subr.bf16.mxu0 0
    %750 = vmatpush2.bf16.msra.mxu0 %v539
    %751 = vmatprep.subr.bf16.mxu0 0
    %752 = vmatpush2.bf16.msra.mxu0 %v538
    %753 = vmatprep.subr.bf16.mxu0 0
    %754 = vmatpush2.bf16.msra.mxu0 %v537
    %755 = vmatprep.subr.bf16.mxu0 0
    %756 = vmatpush2.bf16.msra.mxu0 %v536
    %757 = vmatprep.subr.bf16.mxu0 0
    %758 = vmatpush2.bf16.msra.mxu0 %v535
    %759 = vmatprep.subr.bf16.mxu0 0
    %760 = vmatpush2.bf16.msra.mxu0 %v534
    %761 = vmatprep.mubr.bf16.mxu0 %v86
    %762 = vmatmul.mubr.bf16.gmra.mxu0 %v85
    %v763 = vpop.f32.mrf.mxu0
    %v764 = vadd.f32 %v723, %v763
    %v765 = vpop.f32.mrf.mxu0
    %v766 = vpop.f32.mrf.mxu0
    %v767 = vadd.f32 %v726, %v766
    %v768 = vpop.f32.mrf.mxu0
    %769 = vdwg.mxu0
    %v770 = vmax.f32 %v764, 0.0
    %v771 = vmax.f32 %v767, 0.0
    %v772 = vpack.c.bf16 %v771, %v770
    %v773 = vld [vmem:[#allocation7] sm:$0xf]
    %v774 = vld [vmem:[#allocation7 + $0x4] sm:$0xf]
    %v775 = vld [vmem:[#allocation7 + $0x8] sm:$0xf]
    %v776 = vld [vmem:[#allocation7 + $0xc] sm:$0xf]
    %v777 = vld [vmem:[#allocation7 + $0x10] sm:$0xf]
    %v778 = vld [vmem:[#allocation7 + $0x14] sm:$0xf]
    %v779 = vld [vmem:[#allocation7 + $0x18] sm:$0xf]
    %v780 = vld [vmem:[#allocation7 + $0x1c] sm:$0xf]
    %v781 = vld [vmem:[#allocation7 + $0x20] sm:$0xf]
    %v782 = vld [vmem:[#allocation7 + $0x24] sm:$0xf]
    %v783 = vld [vmem:[#allocation7 + $0x28] sm:$0xf]
    %v784 = vld [vmem:[#allocation7 + $0x2c] sm:$0xf]
    %v785 = vld [vmem:[#allocation7 + $0x30] sm:$0xf]
    %v786 = vld [vmem:[#allocation7 + $0x34] sm:$0xf]
    %v787 = vld [vmem:[#allocation7 + $0x38] sm:$0xf]
    %v788 = vld [vmem:[#allocation7 + $0x3c] sm:$0xf]
    %v789 = vld [vmem:[%s4] sm:$0x1]
    %v791 = vlaneseq
    %v792 = vshrl.u32 %v791, 7
    %v793 = vsub.s32 0, %v792
    %v794 = vrot.slane %v789, %v793
    %v812 = vunpack.c.l.b16 %v773
    %v813 = vunpack.c.l.b16 %v774
    %v814 = vunpack.c.l.b16 %v775
    %v815 = vunpack.c.l.b16 %v776
    %v816 = vunpack.c.l.b16 %v777
    %v817 = vunpack.c.l.b16 %v778
    %v818 = vunpack.c.l.b16 %v779
    %v819 = vunpack.c.l.b16 %v780
    %v820 = vunpack.c.l.b16 %v781
    %v821 = vunpack.c.l.b16 %v782
    %v822 = vunpack.c.l.b16 %v783
    %v823 = vunpack.c.l.b16 %v784
    %v824 = vunpack.c.l.b16 %v785
    %v825 = vunpack.c.l.b16 %v786
    %v826 = vunpack.c.l.b16 %v787
    %v827 = vunpack.c.l.b16 %v788
    %v828 = vpack.c.b16 %v813, %v812
    %v829 = vpack.c.b16 %v815, %v814
    %v830 = vpack.c.b16 %v817, %v816
    %v831 = vpack.c.b16 %v819, %v818
    %v832 = vpack.c.b16 %v821, %v820
    %v833 = vpack.c.b16 %v823, %v822
    %v834 = vpack.c.b16 %v825, %v824
    %v835 = vpack.c.b16 %v827, %v826
    %844 = vmatprep.subr.bf16.mxu0 0
    %845 = vmatpush1.bf16.msra.mxu0 %v835
    %846 = vmatprep.subr.bf16.mxu0 0
    %847 = vmatpush1.bf16.msra.mxu0 %v834
    %848 = vmatprep.subr.bf16.mxu0 0
    %849 = vmatpush1.bf16.msra.mxu0 %v833
    %850 = vmatprep.subr.bf16.mxu0 0
    %851 = vmatpush1.bf16.msra.mxu0 %v832
    %852 = vmatprep.subr.bf16.mxu0 0
    %853 = vmatpush1.bf16.msra.mxu0 %v831
    %854 = vmatprep.subr.bf16.mxu0 0
    %855 = vmatpush1.bf16.msra.mxu0 %v830
    %856 = vmatprep.subr.bf16.mxu0 0
    %857 = vmatpush1.bf16.msra.mxu0 %v829
    %858 = vmatprep.subr.bf16.mxu0 0
    %859 = vmatpush1.bf16.msra.mxu0 %v828
    %860 = vmatprep.subr.bf16.mxu0 0
    %861 = vmatpush2.bf16.msra.mxu0 0
    %862 = vmatprep.subr.bf16.mxu0 0
    %863 = vmatpush2.bf16.msra.mxu0 0
    %864 = vmatprep.subr.bf16.mxu0 0
    %865 = vmatpush2.bf16.msra.mxu0 0
    %866 = vmatprep.subr.bf16.mxu0 0
    %867 = vmatpush2.bf16.msra.mxu0 0
    %868 = vmatprep.subr.bf16.mxu0 0
    %869 = vmatpush2.bf16.msra.mxu0 0
    %870 = vmatprep.subr.bf16.mxu0 0
    %871 = vmatpush2.bf16.msra.mxu0 0
    %872 = vmatprep.subr.bf16.mxu0 0
    %873 = vmatpush2.bf16.msra.mxu0 0
    %874 = vmatprep.subr.bf16.mxu0 0
    %875 = vmatpush2.bf16.msra.mxu0 0
    %876 = vmatprep.mubr.bf16.mxu0 0
    %877 = vmatmul.mubr.bf16.gmra.mxu0 %v772
    %v878 = vpop.f32.mrf.mxu0
    %v879 = vadd.f32 %v794, %v878
    %v880 = vpop.f32.mrf.mxu0
    %v881 = vpop.f32.mrf.mxu0
    %v882 = vadd.f32 %v794, %v881
    %v883 = vpop.f32.mrf.mxu0
    %884 = vdwg.mxu0
    %v885 = vpack.c.bf16 %v882, %v879
    %v887 = vunpack.c.l.b16 %v885
    %v888 = vunpack.c.h.b16 %v885
    %v889 = vpack.c.b16 %v887, %v887
    %v890 = vpack.c.b16 %v888, %v888
    %893 = vst [vmem:[#allocation8] sm:$0xf] %v889
    %894 = vst [vmem:[#allocation8 + $0x4] sm:$0xf] %v890
    // Predicated region
    $region34: #{tpu_custom_call.1} parent=1 // pred_check
      _
    $region35: #{tpu_custom_call.1} parent=1 // pred_check_branch
      %896 = sbr.rel (0) target = $region37
    $region36: #{tpu_custom_call.1} parent=1 // pred_region
      %s898 = ssub.s32 128, 128
      %899 = vsyncadd [#allocation4], %s898
      %s900 = sshll.u32 [#allocation8], 4
      %s901 = int_to_ptr.vmem [resolvable:$true] %s900
      %906 = dma.vmem_to_hbm [thread:$0]  %s901, 128, %s5, [#allocation4], 64, 64, 4
    $region37: #{tpu_custom_call.1} parent=1 // pred_fallthru
      _
    // Predicated region
    $region38: #{tpu_custom_call.1} parent=1 // pred_check
      _
    $region39: #{tpu_custom_call.1} parent=1 // pred_check_branch
      %908 = sbr.rel (0) target = $region41
    $region40: #{tpu_custom_call.1} parent=1 // pred_region
      %909 = dma.done [#allocation4], 128
    $region41: #{tpu_custom_call.1} parent=1 // pred_fallthru
      _
    %910 = vsyncpa [#allocation3], 1
    %911 = vsyncpa [#allocation6], 1
    %912 = vsyncpa [#allocation4], 1

</llo_original>
